<compile_context>
chip_gen: v5e
topology: v5e:2x2
jax: 0.10.0
libtpu: 0.0.40
codegen_flags: <defaults>
</compile_context>

<pallas_src>
import functools
import math

import jax
import jax.numpy as jnp
from jax.experimental import pallas as pl
from jax.experimental.pallas import tpu as pltpu


def _pair(v):
    return (v, v) if isinstance(v, int) else tuple(v)


def _round_up(a, b):
    return -(-a // b) * b


def _phase_taps(k, s, p):
    """Per output phase r in [0, s): taps [(d, kk)] with kk ≡ (r + p) (mod s).

    Output element oh = s*q + r receives x[q + d] * W[..., kk] for each tap,
    where d = (r + p - kk) // s (may be negative -> handled by zero padding).
    """
    taps = []
    for r in range(s):
        taps.append([((r + p - kk) // s, kk) for kk in range(k)
                     if (r + p - kk) % s == 0])
    return taps


def _make_kernel(phase_prog, shifts, wpp, lwp, n_phase, tile_cout):
    """phase_prog: per phase, tuple of (matmul-idx, shift-idx); all static."""

    def kernel(w_ref, b_ref, x_ref, o_ref, acc_ref):
        # w_ref : (n_mm, tile_cout, C_big)     packed per-tap weight matrices
        # b_ref : (tile_cout, 1) f32           bias
        # x_ref : (1, 1, C_big, blk_rows*Wpp)  row-block (with halo) of the input
        # o_ref : (1, PH, tile_cout, lwp)      per-phase flattened output rows
        # acc_ref: (tile_cout, lwp) f32        accumulator scratch
        # Hoisted row-shifted views: one slice per *distinct* row shift (1-2),
        # shared by every phase -> no per-tap lane-rotate materialisations.
        xs = [x_ref[0, 0, :, s * wpp: s * wpp + lwp] for s in shifts]
        bias = b_ref[...]                                    # (tile_cout, 1) f32
        for p in range(n_phase):
            prog = phase_prog[p]
            if not prog:                                     # phase has no taps
                o_ref[0, p] = jnp.broadcast_to(bias, (tile_cout, lwp)).astype(o_ref.dtype)
                continue
            for j, (mm, si) in enumerate(prog):
                c = jnp.dot(w_ref[mm], xs[si], preferred_element_type=jnp.float32)
                if j == 0:
                    acc_ref[...] = c
                else:
                    acc_ref[...] += c
            o_ref[0, p] = (acc_ref[...] + bias).astype(o_ref.dtype)

    return kernel


@functools.partial(jax.jit,
                   static_argnames=("stride", "padding", "output_size", "compute_dtype"))
def my_conv_transpose2d(x, weight, bias, *, stride, padding, output_size,
                        compute_dtype=None):
    """Forward of MyConvTranspose2d: ConvTranspose2d(x, output_size=output_size).

    x:      (N, C_in, H, W)
    weight: (C_in, C_out, K_h, K_w)   (PyTorch ConvTranspose2d layout, groups=1)
    bias:   (C_out,)
    compute_dtype: optional MXU operand dtype (e.g. jnp.bfloat16); default x.dtype.
    """
    n, c_in, h_in, w_in = x.shape
    wc_in, c_out, k_h, k_w = weight.shape
    assert wc_in == c_in  # TODO(synk): groups != 1 not supported.

    s_h, s_w = _pair(stride)
    p_h, p_w = _pair(padding)
    o_h, o_w = _pair(output_size)

    # output_padding implied by output_size (PyTorch ConvTranspose2d._output_padding)
    op_h = o_h - ((h_in - 1) * s_h - 2 * p_h + k_h)
    op_w = o_w - ((w_in - 1) * s_w - 2 * p_w + k_w)
    if not (0 <= op_h < s_h and 0 <= op_w < s_w):
        raise ValueError("output_size not reachable for this ConvTranspose2d config")

    cdt = x.dtype if compute_dtype is None else jnp.dtype(compute_dtype)
    out_dtype = x.dtype

    # ------------------ static sub-pixel (phase) decomposition ------------------
    taps_h = _phase_taps(k_h, s_h, p_h)            # per rh: [(dh, kh), ...]
    taps_w = _phase_taps(k_w, s_w, p_w)            # per rw: [(dw, kw), ...]
    qh, qw = -(-o_h // s_h), -(-o_w // s_w)        # per-phase output rows / cols
    ph = s_h * s_w

    # Column shifts folded into the channel (contraction) axis.
    dw_vals = sorted({dw for tw in taps_w for (dw, _) in tw}) or [0]
    dw_index = {dw: i for i, dw in enumerate(dw_vals)}
    c_big = len(dw_vals) * c_in

    # Row shifts stay as flat offsets into the row-major (row, Wpp) layout.
    dh_vals = sorted({dh for th in taps_h for (dh, _) in th}) or [0]
    pad_top = max(0, -dh_vals[0])
    sh_vals = sorted({dh + pad_top for dh in dh_vals})        # all >= 0
    sh_max = sh_vals[-1]

    n_mm_cnt = max(1, sum(len(taps_h[rh])
                          for rh in range(s_h) for rw in range(s_w)
                          if taps_h[rh] and taps_w[rw]))

    # ------------------ generation-aware tile sizing ----------------------------
    in_item = jnp.dtype(cdt).itemsize
    out_item = jnp.dtype(out_dtype).itemsize
    try:  # 128 MiB on v5e/v6e, 64 MiB on v7x
        vmem_cap = int(getattr(pltpu.get_tpu_info(), "vmem_capacity_bytes", 0)) or (64 << 20)
    except Exception:
        vmem_cap = 64 << 20
    vmem_limit = min(int(vmem_cap * 0.85), 100 << 20)
    budget = int(vmem_limit * 0.75)            # budget for live (double-buffered) blocks

    def _estimate(tc, tq):
        stp = 128 // math.gcd(tq, 128)
        wpp_ = _round_up(max(qw, 1), stp)
        lwp_ = tq * wpp_
        x_blk = c_big * (tq + sh_max) * wpp_ * in_item
        o_blk = ph * tc * lwp_ * out_item
        w_blk = n_mm_cnt * tc * c_big * in_item
        acc = tc * lwp_ * 4
        hoist = len(sh_vals) * c_big * lwp_ * in_item
        return 2 * (x_blk + o_blk + w_blk) + acc + hoist

    c_cands = [c_out] if c_out <= 8 else sorted(
        {_round_up(-(-c_out // nb), 8) for nb in range(1, 17)})
    q_cands = [qh] if qh <= 8 else sorted(
        {_round_up(-(-qh // nb), 8) for nb in range(1, 33)})
    tile_cout, tile_q, best = c_cands[0], q_cands[0], -1
    for tc in c_cands:
        for tq in q_cands:
            if _estimate(tc, tq) <= budget and tc * tq > best:
                best, tile_cout, tile_q = tc * tq, tc, tq

    cop = _round_up(c_out, tile_cout)
    n_cb = cop // tile_cout
    qh_pad = _round_up(qh, tile_q)
    n_qb = qh_pad // tile_q
    step = 128 // math.gcd(tile_q, 128)
    wpp = _round_up(max(qw, 1), step)          # lane-padded row stride
    lwp = tile_q * wpp                         # multiple of 128 -> unmasked vst
    blk_rows = tile_q + sh_max                 # row block + halo
    pad_bottom = max(0, qh_pad + sh_max - pad_top - h_in)

    # ------------------ XLA-side layout prep (UN-dilated input) -----------------
    xc = x.astype(cdt)
    cols = []
    for dw in dw_vals:                          # column-shifted channel copies
        lo, hi = max(0, dw), min(w_in, dw + wpp)
        if hi > lo:
            piece = jnp.pad(xc[:, :, :, lo:hi],
                            ((0, 0), (0, 0), (0, 0),
                             (lo - dw, wpp - (lo - dw) - (hi - lo))))
        else:
            piece = jnp.zeros((n, c_in, h_in, wpp), cdt)
        cols.append(piece)
    x_big = cols[0] if len(cols) == 1 else jnp.concatenate(cols, axis=1)
    x_big = jnp.pad(x_big, ((0, 0), (0, 0), (pad_top, pad_bottom), (0, 0)))
    # Row-block slabs with their (tiny) halo pre-materialised so the kernel uses
    # plain non-overlapping BlockSpec pipelining.
    x_slab = jnp.stack(
        [x_big[:, :, qb * tile_q: qb * tile_q + blk_rows, :] for qb in range(n_qb)],
        axis=1).reshape(n, n_qb, c_big, blk_rows * wpp)

    # Packed per-(phase, row-tap) weight matrices (C_out x n_dw*C_in).  Column
    # taps occupy their channel block; absent (phase, dw) combos are zero.
    sh_index = {s: i for i, s in enumerate(sh_vals)}
    w_mats, phase_prog = [], []
    for rh in range(s_h):
        for rw in range(s_w):
            prog = []
            if taps_h[rh] and taps_w[rw]:
                for dh, kh in taps_h[rh]:
                    m = jnp.zeros((c_out, c_big), jnp.float32)
                    for dw, kw in taps_w[rw]:
                        blk = dw_index[dw]
                        m = m.at[:, blk * c_in:(blk + 1) * c_in].set(
                            weight[:, :, kh, kw].T.astype(jnp.float32))
                    prog.append((len(w_mats), sh_index[dh + pad_top]))
                    w_mats.append(m)
            phase_prog.append(tuple(prog))
    phase_prog = tuple(phase_prog)
    if not w_mats:
        w_mats = [jnp.zeros((c_out, c_big), jnp.float32)]
    n_mm = len(w_mats)
    w_packed = jnp.pad(jnp.stack(w_mats), ((0, 0), (0, cop - c_out), (0, 0))).astype(cdt)
    b_packed = jnp.pad(bias.astype(jnp.float32), (0, cop - c_out)).reshape(cop, 1)

    kernel = _make_kernel(phase_prog, tuple(sh_vals), wpp, lwp, ph, tile_cout)

    out_flat = pl.pallas_call(
        kernel,
        out_shape=jax.ShapeDtypeStruct((n, ph, cop, qh_pad * wpp), out_dtype),
        grid=(n, n_qb, n_cb),
        in_specs=[
            # TODO(synk): single-buffer (pipeline_mode=pl.Buffered(1)) the
            # grid-invariant weight/bias specs once worth the extra plumbing.
            pl.BlockSpec((n_mm, tile_cout, c_big), lambda b, q, c: (0, c, 0)),
            pl.BlockSpec((tile_cout, 1), lambda b, q, c: (c, 0)),
            pl.BlockSpec((1, 1, c_big, blk_rows * wpp), lambda b, q, c: (b, q, 0, 0)),
        ],
        out_specs=pl.BlockSpec((1, ph, tile_cout, lwp), lambda b, q, c: (b, 0, c, q)),
        scratch_shapes=[pltpu.VMEM((tile_cout, lwp), jnp.float32)],
        compiler_params=pltpu.CompilerParams(
            dimension_semantics=("parallel", "parallel", "parallel"),
            vmem_limit_bytes=vmem_limit,
        ),
    )(w_packed, b_packed, x_slab)

    # Interleave the phases back into NCHW and crop padding (single XLA pass).
    y = out_flat.reshape(n, s_h, s_w, cop, qh_pad, wpp)
    y = jnp.transpose(y, (0, 3, 4, 1, 5, 2)).reshape(n, cop, qh_pad * s_h, wpp * s_w)
    return y[:, :c_out, :o_h, :o_w]


def _reference_conv_transpose2d(x, weight, bias, *, stride, padding, output_size):
    """Pure-XLA reference (same math as torch.nn.ConvTranspose2d forward)."""
    n, c_in, h_in, w_in = x.shape
    _, c_out, k_h, k_w = weight.shape
    s_h, s_w = _pair(stride)
    p_h, p_w = _pair(padding)
    o_h, o_w = _pair(output_size)
    op_h = o_h - ((h_in - 1) * s_h - 2 * p_h + k_h)
    op_w = o_w - ((w_in - 1) * s_w - 2 * p_w + k_w)
    w_conv = jnp.transpose(jnp.flip(weight, axis=(2, 3)), (1, 0, 2, 3))  # (C_out,C_in,K,K)
    y = jax.lax.conv_general_dilated(
        x, w_conv, window_strides=(1, 1),
        padding=((k_h - 1 - p_h, k_h - 1 - p_h + op_h),
                 (k_w - 1 - p_w, k_w - 1 - p_w + op_w)),
        lhs_dilation=(s_h, s_w), rhs_dilation=(1, 1),
        dimension_numbers=("NCHW", "OIHW", "NCHW"),
        precision=jax.lax.Precision.HIGHEST,
    )
    return y + bias[None, :, None, None]


def _check(x, weight, bias, *, stride, padding, output_size, tol=1e-3):
    y = my_conv_transpose2d(x, weight, bias, stride=stride, padding=padding,
                            output_size=output_size)
    jax.block_until_ready(y)
    o_h, o_w = _pair(output_size)
    assert y.shape == (x.shape[0], weight.shape[1], o_h, o_w), y.shape
    assert bool(jnp.all(jnp.isfinite(y)))
    y_ref = _reference_conv_transpose2d(x, weight, bias, stride=stride,
                                        padding=padding, output_size=output_size)
    err = float(jnp.max(jnp.abs(y - y_ref)))
    assert err < tol, f"max abs error vs XLA reference: {err}"


if __name__ == "__main__":
    key = jax.random.PRNGKey(0)
    k_x, k_w, k_b = jax.random.split(key, 3)

    N, C_IN, C_OUT, H, W = 2, 4, 8, 16, 16
    x = jax.random.normal(k_x, (N, C_IN, H, W), dtype=jnp.float32)
    b = jax.random.normal(k_b, (C_OUT,), dtype=jnp.float32)

    # Decoder-style upsample: ConvTranspose2d(4, 8, kernel_size=3, stride=2,
    # padding=1) with output_size=(32, 32)   (=> output_padding=1).
    w3 = 0.1 * jax.random.normal(k_w, (C_IN, C_OUT, 3, 3), dtype=jnp.float32)
    _check(x, w3, b, stride=2, padding=1, output_size=(32, 32))

    # DPT-reassemble-style case: kernel_size == stride (1 tap / phase, no halo).
    w2 = 0.1 * jax.random.normal(k_w, (C_IN, C_OUT, 2, 2), dtype=jnp.float32)
    _check(x, w2, b, stride=2, padding=0, output_size=(32, 32))

    print("KERNEL_OK")
</pallas_src>

<mosaic_0001>
module attributes {stable_mosaic.version = 11 : i64} {
  func.func @kernel(%arg0: i32, %arg1: i32, %arg2: i32, %arg3: memref<6x8x8xf32, #tpu.memory_space<vmem>>, %arg4: memref<8x1xf32, #tpu.memory_space<vmem>>, %arg5: memref<1x1x8x272xf32, #tpu.memory_space<vmem>>, %arg6: memref<1x4x8x256xf32, #tpu.memory_space<vmem>>, %arg7: memref<8x256xf32, #tpu.memory_space<vmem>>) attributes {dimension_semantics = [#tpu.dimension_semantics<parallel>, #tpu.dimension_semantics<parallel>, #tpu.dimension_semantics<parallel>], iteration_bounds = array<i64: 2, 1, 1>, scalar_prefetch = 0 : i64, scratch_operands = 1 : i64, tpu.core_type = #tpu.core_type<tc>, window_params = [{transform_indices = @transform_0, window_bounds = array<i64: 6, 8, 8>}, {transform_indices = @transform_1, window_bounds = array<i64: 8, 1>}, {transform_indices = @transform_2, window_bounds = array<i64: 1, 1, 8, 272>}, {transform_indices = @transform_3, window_bounds = array<i64: 1, 4, 8, 256>}]} {
    %c0 = arith.constant 0 : index
    %c0_0 = arith.constant 0 : index
    %c0_1 = arith.constant 0 : index
    %c0_2 = arith.constant 0 : index
    %0 = vector.load %arg5[%c0, %c0_0, %c0_1, %c0_2] : memref<1x1x8x272xf32, #tpu.memory_space<vmem>>, vector<1x1x8x256xf32>
    %1 = vector.shape_cast %0 : vector<1x1x8x256xf32> to vector<8x256xf32>
    %c0_3 = arith.constant 0 : index
    %c0_4 = arith.constant 0 : index
    %c0_5 = arith.constant 0 : index
    %c16 = arith.constant 16 : index
    %2 = vector.load %arg5[%c0_3, %c0_4, %c0_5, %c16] : memref<1x1x8x272xf32, #tpu.memory_space<vmem>>, vector<1x1x8x256xf32>
    %3 = vector.shape_cast %2 : vector<1x1x8x256xf32> to vector<8x256xf32>
    %c0_6 = arith.constant 0 : index
    %c0_7 = arith.constant 0 : index
    %4 = vector.load %arg4[%c0_6, %c0_7] : memref<8x1xf32, #tpu.memory_space<vmem>>, vector<8x1xf32>
    %c0_8 = arith.constant 0 : index
    %c0_9 = arith.constant 0 : index
    %c0_10 = arith.constant 0 : index
    %5 = vector.load %arg3[%c0_8, %c0_9, %c0_10] : memref<6x8x8xf32, #tpu.memory_space<vmem>>, vector<1x8x8xf32>
    %6 = vector.shape_cast %5 : vector<1x8x8xf32> to vector<8x8xf32>
    %cst = arith.constant dense<0.000000e+00> : vector<8x256xf32>
    %7 = tpu.matmul %6, %1, %cst {dimension_numbers = #tpu.dot_dimension_numbers<[1], [0], [0], [1], [0, 0, 1, 1], [], []>} : vector<8x8xf32>, vector<8x256xf32>, vector<8x256xf32> -> vector<8x256xf32>
    %c0_11 = arith.constant 0 : index
    %c0_12 = arith.constant 0 : index
    %8 = vector.load %arg7[%c0_11, %c0_12] : memref<8x256xf32, #tpu.memory_space<vmem>>, vector<8x256xf32>
    tpu.vector_store %arg7[%c0_11, %c0_12], %7 {strides = array<i32>} : memref<8x256xf32, #tpu.memory_space<vmem>>, vector<8x256xf32>,
    %c0_13 = arith.constant 0 : index
    %c0_14 = arith.constant 0 : index
    %9 = vector.load %arg7[%c0_13, %c0_14] : memref<8x256xf32, #tpu.memory_space<vmem>>, vector<8x256xf32>
    %10 = vector.broadcast %4 : vector<8x1xf32> to vector<8x256xf32>
    %11 = arith.addf %9, %10 : vector<8x256xf32>
    %c0_15 = arith.constant 0 : index
    %c0_16 = arith.constant 0 : index
    %c0_17 = arith.constant 0 : index
    %c0_18 = arith.constant 0 : index
    %12 = vector.load %arg6[%c0_15, %c0_16, %c0_17, %c0_18] : memref<1x4x8x256xf32, #tpu.memory_space<vmem>>, vector<1x1x8x256xf32>
    %13 = vector.shape_cast %12 : vector<1x1x8x256xf32> to vector<8x256xf32>
    %14 = vector.shape_cast %11 : vector<8x256xf32> to vector<1x1x8x256xf32>
    tpu.vector_store %arg6[%c0_15, %c0_16, %c0_17, %c0_18], %14 {strides = array<i32>} : memref<1x4x8x256xf32, #tpu.memory_space<vmem>>, vector<1x1x8x256xf32>,
    %c1 = arith.constant 1 : index
    %c0_19 = arith.constant 0 : index
    %c0_20 = arith.constant 0 : index
    %15 = vector.load %arg3[%c1, %c0_19, %c0_20] : memref<6x8x8xf32, #tpu.memory_space<vmem>>, vector<1x8x8xf32>
    %16 = vector.shape_cast %15 : vector<1x8x8xf32> to vector<8x8xf32>
    %cst_21 = arith.constant dense<0.000000e+00> : vector<8x256xf32>
    %17 = tpu.matmul %16, %1, %cst_21 {dimension_numbers = #tpu.dot_dimension_numbers<[1], [0], [0], [1], [0, 0, 1, 1], [], []>} : vector<8x8xf32>, vector<8x256xf32>, vector<8x256xf32> -> vector<8x256xf32>
    %c0_22 = arith.constant 0 : index
    %c0_23 = arith.constant 0 : index
    %18 = vector.load %arg7[%c0_22, %c0_23] : memref<8x256xf32, #tpu.memory_space<vmem>>, vector<8x256xf32>
    tpu.vector_store %arg7[%c0_22, %c0_23], %17 {strides = array<i32>} : memref<8x256xf32, #tpu.memory_space<vmem>>, vector<8x256xf32>,
    %c0_24 = arith.constant 0 : index
    %c0_25 = arith.constant 0 : index
    %19 = vector.load %arg7[%c0_24, %c0_25] : memref<8x256xf32, #tpu.memory_space<vmem>>, vector<8x256xf32>
    %20 = vector.broadcast %4 : vector<8x1xf32> to vector<8x256xf32>
    %21 = arith.addf %19, %20 : vector<8x256xf32>
    %c0_26 = arith.constant 0 : index
    %c1_27 = arith.constant 1 : index
    %c0_28 = arith.constant 0 : index
    %c0_29 = arith.constant 0 : index
    %22 = vector.load %arg6[%c0_26, %c1_27, %c0_28, %c0_29] : memref<1x4x8x256xf32, #tpu.memory_space<vmem>>, vector<1x1x8x256xf32>
    %23 = vector.shape_cast %22 : vector<1x1x8x256xf32> to vector<8x256xf32>
    %24 = vector.shape_cast %21 : vector<8x256xf32> to vector<1x1x8x256xf32>
    tpu.vector_store %arg6[%c0_26, %c1_27, %c0_28, %c0_29], %24 {strides = array<i32>} : memref<1x4x8x256xf32, #tpu.memory_space<vmem>>, vector<1x1x8x256xf32>,
    %c2 = arith.constant 2 : index
    %c0_30 = arith.constant 0 : index
    %c0_31 = arith.constant 0 : index
    %25 = vector.load %arg3[%c2, %c0_30, %c0_31] : memref<6x8x8xf32, #tpu.memory_space<vmem>>, vector<1x8x8xf32>
    %26 = vector.shape_cast %25 : vector<1x8x8xf32> to vector<8x8xf32>
    %cst_32 = arith.constant dense<0.000000e+00> : vector<8x256xf32>
    %27 = tpu.matmul %26, %3, %cst_32 {dimension_numbers = #tpu.dot_dimension_numbers<[1], [0], [0], [1], [0, 0, 1, 1], [], []>} : vector<8x8xf32>, vector<8x256xf32>, vector<8x256xf32> -> vector<8x256xf32>
    %c0_33 = arith.constant 0 : index
    %c0_34 = arith.constant 0 : index
    %28 = vector.load %arg7[%c0_33, %c0_34] : memref<8x256xf32, #tpu.memory_space<vmem>>, vector<8x256xf32>
    tpu.vector_store %arg7[%c0_33, %c0_34], %27 {strides = array<i32>} : memref<8x256xf32, #tpu.memory_space<vmem>>, vector<8x256xf32>,
    %c3 = arith.constant 3 : index
    %c0_35 = arith.constant 0 : index
    %c0_36 = arith.constant 0 : index
    %29 = vector.load %arg3[%c3, %c0_35, %c0_36] : memref<6x8x8xf32, #tpu.memory_space<vmem>>, vector<1x8x8xf32>
    %30 = vector.shape_cast %29 : vector<1x8x8xf32> to vector<8x8xf32>
    %cst_37 = arith.constant dense<0.000000e+00> : vector<8x256xf32>
    %31 = tpu.matmul %30, %1, %cst_37 {dimension_numbers = #tpu.dot_dimension_numbers<[1], [0], [0], [1], [0, 0, 1, 1], [], []>} : vector<8x8xf32>, vector<8x256xf32>, vector<8x256xf32> -> vector<8x256xf32>
    %c0_38 = arith.constant 0 : index
    %c0_39 = arith.constant 0 : index
    %32 = vector.load %arg7[%c0_38, %c0_39] : memref<8x256xf32, #tpu.memory_space<vmem>>, vector<8x256xf32>
    %33 = arith.addf %32, %31 : vector<8x256xf32>
    %c0_40 = arith.constant 0 : index
    %c0_41 = arith.constant 0 : index
    %34 = vector.load %arg7[%c0_40, %c0_41] : memref<8x256xf32, #tpu.memory_space<vmem>>, vector<8x256xf32>
    tpu.vector_store %arg7[%c0_40, %c0_41], %33 {strides = array<i32>} : memref<8x256xf32, #tpu.memory_space<vmem>>, vector<8x256xf32>,
    %c0_42 = arith.constant 0 : index
    %c0_43 = arith.constant 0 : index
    %35 = vector.load %arg7[%c0_42, %c0_43] : memref<8x256xf32, #tpu.memory_space<vmem>>, vector<8x256xf32>
    %36 = vector.broadcast %4 : vector<8x1xf32> to vector<8x256xf32>
    %37 = arith.addf %35, %36 : vector<8x256xf32>
    %c0_44 = arith.constant 0 : index
    %c2_45 = arith.constant 2 : index
    %c0_46 = arith.constant 0 : index
    %c0_47 = arith.constant 0 : index
    %38 = vector.load %arg6[%c0_44, %c2_45, %c0_46, %c0_47] : memref<1x4x8x256xf32, #tpu.memory_space<vmem>>, vector<1x1x8x256xf32>
    %39 = vector.shape_cast %38 : vector<1x1x8x256xf32> to vector<8x256xf32>
    %40 = vector.shape_cast %37 : vector<8x256xf32> to vector<1x1x8x256xf32>
    tpu.vector_store %arg6[%c0_44, %c2_45, %c0_46, %c0_47], %40 {strides = array<i32>} : memref<1x4x8x256xf32, #tpu.memory_space<vmem>>, vector<1x1x8x256xf32>,
    %c4 = arith.constant 4 : index
    %c0_48 = arith.constant 0 : index
    %c0_49 = arith.constant 0 : index
    %41 = vector.load %arg3[%c4, %c0_48, %c0_49] : memref<6x8x8xf32, #tpu.memory_space<vmem>>, vector<1x8x8xf32>
    %42 = vector.shape_cast %41 : vector<1x8x8xf32> to vector<8x8xf32>
    %cst_50 = arith.constant dense<0.000000e+00> : vector<8x256xf32>
    %43 = tpu.matmul %42, %3, %cst_50 {dimension_numbers = #tpu.dot_dimension_numbers<[1], [0], [0], [1], [0, 0, 1, 1], [], []>} : vector<8x8xf32>, vector<8x256xf32>, vector<8x256xf32> -> vector<8x256xf32>
    %c0_51 = arith.constant 0 : index
    %c0_52 = arith.constant 0 : index
    %44 = vector.load %arg7[%c0_51, %c0_52] : memref<8x256xf32, #tpu.memory_space<vmem>>, vector<8x256xf32>
    tpu.vector_store %arg7[%c0_51, %c0_52], %43 {strides = array<i32>} : memref<8x256xf32, #tpu.memory_space<vmem>>, vector<8x256xf32>,
    %c5 = arith.constant 5 : index
    %c0_53 = arith.constant 0 : index
    %c0_54 = arith.constant 0 : index
    %45 = vector.load %arg3[%c5, %c0_53, %c0_54] : memref<6x8x8xf32, #tpu.memory_space<vmem>>, vector<1x8x8xf32>
    %46 = vector.shape_cast %45 : vector<1x8x8xf32> to vector<8x8xf32>
    %cst_55 = arith.constant dense<0.000000e+00> : vector<8x256xf32>
    %47 = tpu.matmul %46, %1, %cst_55 {dimension_numbers = #tpu.dot_dimension_numbers<[1], [0], [0], [1], [0, 0, 1, 1], [], []>} : vector<8x8xf32>, vector<8x256xf32>, vector<8x256xf32> -> vector<8x256xf32>
    %c0_56 = arith.constant 0 : index
    %c0_57 = arith.constant 0 : index
    %48 = vector.load %arg7[%c0_56, %c0_57] : memref<8x256xf32, #tpu.memory_space<vmem>>, vector<8x256xf32>
    %49 = arith.addf %48, %47 : vector<8x256xf32>
    %c0_58 = arith.constant 0 : index
    %c0_59 = arith.constant 0 : index
    %50 = vector.load %arg7[%c0_58, %c0_59] : memref<8x256xf32, #tpu.memory_space<vmem>>, vector<8x256xf32>
    tpu.vector_store %arg7[%c0_58, %c0_59], %49 {strides = array<i32>} : memref<8x256xf32, #tpu.memory_space<vmem>>, vector<8x256xf32>,
    %c0_60 = arith.constant 0 : index
    %c0_61 = arith.constant 0 : index
    %51 = vector.load %arg7[%c0_60, %c0_61] : memref<8x256xf32, #tpu.memory_space<vmem>>, vector<8x256xf32>
    %52 = vector.broadcast %4 : vector<8x1xf32> to vector<8x256xf32>
    %53 = arith.addf %51, %52 : vector<8x256xf32>
    %c0_62 = arith.constant 0 : index
    %c3_63 = arith.constant 3 : index
    %c0_64 = arith.constant 0 : index
    %c0_65 = arith.constant 0 : index
    %54 = vector.load %arg6[%c0_62, %c3_63, %c0_64, %c0_65] : memref<1x4x8x256xf32, #tpu.memory_space<vmem>>, vector<1x1x8x256xf32>
    %55 = vector.shape_cast %54 : vector<1x1x8x256xf32> to vector<8x256xf32>
    %56 = vector.shape_cast %53 : vector<8x256xf32> to vector<1x1x8x256xf32>
    tpu.vector_store %arg6[%c0_62, %c3_63, %c0_64, %c0_65], %56 {strides = array<i32>} : memref<1x4x8x256xf32, #tpu.memory_space<vmem>>, vector<1x1x8x256xf32>,
    return
  }
  func.func @transform_0(%arg0: i32, %arg1: i32, %arg2: i32) -> (i32, i32, i32) {
    %c0_i32 = arith.constant 0 : i32
    %c0_i32_0 = arith.constant 0 : i32
    %c0_i32_1 = arith.constant 0 : i32
    return %c0_i32, %arg2, %c0_i32_0 : i32, i32, i32
  }
  func.func @transform_1(%arg0: i32, %arg1: i32, %arg2: i32) -> (i32, i32) {
    %c0_i32 = arith.constant 0 : i32
    %c0_i32_0 = arith.constant 0 : i32
    return %arg2, %c0_i32 : i32, i32
  }
  func.func @transform_2(%arg0: i32, %arg1: i32, %arg2: i32) -> (i32, i32, i32, i32) {
    %c0_i32 = arith.constant 0 : i32
    %c0_i32_0 = arith.constant 0 : i32
    %c0_i32_1 = arith.constant 0 : i32
    return %arg0, %arg1, %c0_i32, %c0_i32_0 : i32, i32, i32, i32
  }
  func.func @transform_3(%arg0: i32, %arg1: i32, %arg2: i32) -> (i32, i32, i32, i32) {
    %c0_i32 = arith.constant 0 : i32
    %c0_i32_0 = arith.constant 0 : i32
    return %arg0, %c0_i32, %arg2, %arg1 : i32, i32, i32, i32
  }
}

</mosaic_0001>

<llo_original>
// kernel: my_conv_transpose2d.1
$region0: #{my_conv_transpose2d.1}
  #allocation0 [shape = 'u32[]', space=smem, size = 0x4, offset = 0x4, fixed_abs, tag = 'smem constant byte address 0x4 - core index']
  #allocation1 [shape = 'u32[72,128]{1,0:T(1,128)}', space=vmem, size = 0x9000, scoped, tag = 'internal scratch']
  #allocation2 [shape = 'f32[8,256]{1,0:T(8,128)}', space=vmem, size = 0x2000, scoped, tag = 'scratch operand']
  %s0 = inlined_call_operand.vmem [shape: f32[6,8,8], index: 0, kind: input, shape index: {}]
  %s1 = inlined_call_operand.vmem [shape: f32[8,1], index: 1, kind: input, shape index: {}]
  %s2 = inlined_call_operand.vmem [shape: f32[2,1,8,272], index: 2, kind: input, shape index: {}]
  %s3 = inlined_call_operand.vmem [shape: f32[2,4,8,256], index: 3, kind: output, shape index: {}]
  %s4 = sld [smem:[#allocation0]]
  $region45: #{my_conv_transpose2d.1} parent=0
    _
  %s6 = ssub.s32 1, %s4
  %s7 = scalar_select 0, %s6, %s4
  loop: start=0, step=1, limit=4
  $region2: #{my_conv_transpose2d.1} parent=0 // loop_pre_header
    _
  $region3: #{my_conv_transpose2d.1} parent=0 // loop_header
    %s9 = sphi 0, %s13
    %p10 = scmp.ge.s32.totalorder %s9, 4
    %s16 = sphi 0, %s35
    %s17 = sphi 0, %s31
    %s18 = sphi 0, %s27
    %s19 = sphi 0, %s16
    %s20 = sphi 0, %s17
    %s21 = sphi 0, %s18
    %s22 = sphi 0, %s19
    %s23 = sphi 0, %s20
    %s24 = sphi 0, %s21
    %s38 = sphi 0, %s40
    %s41 = sphi 0, %s38
    %s42 = sphi 0, %s41
    %s58 = sphi 0, %s42
    %s64 = sphi 0, %s66
    %s67 = sphi 0, %s64
    %s68 = sphi 0, %s67
    %s84 = sphi 0, %s68
    %s92 = sphi 0, %s94
    %s95 = sphi 0, %s92
    %s96 = sphi 0, %s95
    %s112 = sphi 0, %s96
    %s122 = sphi 0, %s124
    %s125 = sphi 0, %s122
    %s126 = sphi 0, %s125
    %s142 = sphi 0, %s126
  $region4: #{my_conv_transpose2d.1} parent=0 // loop_header_branch
    %12 = sbr.rel (%p10) target = $region8
  $region5: #{my_conv_transpose2d.1} parent=0 // loop_body
    %s14 = ssub.s32 %s9, 1
    %s15 = ssub.s32 %s9, 2
    %s25 = sadd.s32 1, %s18
    %p26 = scmp.ge.s32.totalorder %s25, 1
    %s27 = scalar_select %p26, 0, %s25
    %s28 = sadd.s32 1, %s17
    %s29 = scalar_select %p26, %s28, %s17
    %p30 = scmp.ge.s32.totalorder %s29, 1
    %s31 = scalar_select %p30, 0, %s29
    %s32 = sadd.s32 1, %s16
    %s33 = scalar_select %p30, %s32, %s16
    %p34 = scmp.ge.s32.totalorder %s33, 2
    %s35 = scalar_select %p34, 0, %s33
    %s36 = ssub.s32 %s18, %s27
    %p37 = scmp.eq.s32.totalorder %s36, 0
    %s39 = sadd.s32 %s38, 1
    %s40 = scalar_select %p37, %s38, %s39
    %p43 = pneg %p37
    %p44 = scmp.eq.s32.totalorder %s9, 1
    %p45 = por %p43, %p44
    %p46 = scmp.ne.s32.totalorder %s38, %s41
    %p47 = scmp.eq.s32.totalorder %s9, 0
    %p48 = por %p46, %p47
    %p49 = scmp.ne.s32.totalorder %s38, %s41
    %p50 = scmp.eq.s32.totalorder %s14, 1
    %p51 = por %p49, %p50
    %p52 = scmp.ne.s32.totalorder %s41, %s42
    %p53 = scmp.eq.s32.totalorder %s14, 0
    %p54 = por %p52, %p53
    %p55 = scmp.ne.s32.totalorder %s41, %s42
    %p56 = scmp.eq.s32.totalorder %s15, 1
    %p57 = por %p55, %p56
    %p59 = scmp.ne.s32.totalorder %s42, %s58
    %p60 = scmp.eq.s32.totalorder %s15, 0
    %p61 = por %p59, %p60
    %s62 = ssub.s32 %s18, %s27
    %p63 = scmp.eq.s32.totalorder %s62, 0
    %s65 = sadd.s32 %s64, 1
    %s66 = scalar_select %p63, %s64, %s65
    %p69 = pneg %p63
    %p70 = scmp.eq.s32.totalorder %s9, 1
    %p71 = por %p69, %p70
    %p72 = scmp.ne.s32.totalorder %s64, %s67
    %p73 = scmp.eq.s32.totalorder %s9, 0
    %p74 = por %p72, %p73
    %p75 = scmp.ne.s32.totalorder %s64, %s67
    %p76 = scmp.eq.s32.totalorder %s14, 1
    %p77 = por %p75, %p76
    %p78 = scmp.ne.s32.totalorder %s67, %s68
    %p79 = scmp.eq.s32.totalorder %s14, 0
    %p80 = por %p78, %p79
    %p81 = scmp.ne.s32.totalorder %s67, %s68
    %p82 = scmp.eq.s32.totalorder %s15, 1
    %p83 = por %p81, %p82
    %p85 = scmp.ne.s32.totalorder %s68, %s84
    %p86 = scmp.eq.s32.totalorder %s15, 0
    %p87 = por %p85, %p86
    %s88 = ssub.s32 %s16, %s35
    %s89 = ssub.s32 %s17, %s31
    %s90 = sor.u32 %s88, %s89
    %p91 = scmp.eq.s32.totalorder %s90, 0
    %s93 = sadd.s32 %s92, 1
    %s94 = scalar_select %p91, %s92, %s93
    %p97 = pneg %p91
    %p98 = scmp.eq.s32.totalorder %s9, 1
    %p99 = por %p97, %p98
    %p100 = scmp.ne.s32.totalorder %s92, %s95
    %p101 = scmp.eq.s32.totalorder %s9, 0
    %p102 = por %p100, %p101
    %p103 = scmp.ne.s32.totalorder %s92, %s95
    %p104 = scmp.eq.s32.totalorder %s14, 1
    %p105 = por %p103, %p104
    %p106 = scmp.ne.s32.totalorder %s95, %s96
    %p107 = scmp.eq.s32.totalorder %s14, 0
    %p108 = por %p106, %p107
    %p109 = scmp.ne.s32.totalorder %s95, %s96
    %p110 = scmp.eq.s32.totalorder %s15, 1
    %p111 = por %p109, %p110
    %p113 = scmp.ne.s32.totalorder %s96, %s112
    %p114 = scmp.eq.s32.totalorder %s15, 0
    %p115 = por %p113, %p114
    %s116 = ssub.s32 %s16, %s35
    %s117 = ssub.s32 %s18, %s27
    %s118 = sor.u32 %s116, %s117
    %s119 = ssub.s32 %s17, %s31
    %s120 = sor.u32 %s118, %s119
    %p121 = scmp.eq.s32.totalorder %s120, 0
    %s123 = sadd.s32 %s122, 1
    %s124 = scalar_select %p121, %s122, %s123
    %p127 = pneg %p121
    %p128 = scmp.eq.s32.totalorder %s9, 1
    %p129 = por %p127, %p128
    %p130 = scmp.ne.s32.totalorder %s122, %s125
    %p131 = scmp.eq.s32.totalorder %s9, 0
    %p132 = por %p130, %p131
    %p133 = scmp.ne.s32.totalorder %s122, %s125
    %p134 = scmp.eq.s32.totalorder %s14, 1
    %p135 = por %p133, %p134
    %p136 = scmp.ne.s32.totalorder %s125, %s126
    %p137 = scmp.eq.s32.totalorder %s14, 0
    %p138 = por %p136, %p137
    %p139 = scmp.ne.s32.totalorder %s125, %s126
    %p140 = scmp.eq.s32.totalorder %s15, 1
    %p141 = por %p139, %p140
    %p143 = scmp.ne.s32.totalorder %s126, %s142
    %p144 = scmp.eq.s32.totalorder %s15, 0
    %p145 = por %p143, %p144
    %p146 = scmp.le.s32.totalorder 1, %s9
    %p147 = scmp.lt.s32.totalorder %s9, 3
    %p148 = pnand %p146, %p147
    %p149 = pneg %p148
    // Predicated region
    $region9: #{my_conv_transpose2d.1} parent=5 // pred_check
      _
    $region10: #{my_conv_transpose2d.1} parent=5 // pred_check_branch
      %151 = sbr.rel (%p148) target = $region12
    $region11: #{my_conv_transpose2d.1} parent=5 // pred_region
      %s152 = ssub.s32 %s9, 1
      // Predicated region
      $region13: #{my_conv_transpose2d.1} parent=11 // pred_check
        %p153 = pneg %p54
      $region14: #{my_conv_transpose2d.1} parent=11 // pred_check_branch
        %155 = sbr.rel (%p153) target = $region16
      $region15: #{my_conv_transpose2d.1} parent=11 // pred_region
        %p156 = scmp.lt.s32.totalorder %s21, 0
        %s157 = scalar_select %p156, %s21, 0
        %s158 = smul.addr %s157, 8
        %s159 = scalar_lea.vmem %s0, %s158
      $region16: #{my_conv_transpose2d.1} parent=11 // pred_fallthru
        _
      // Predicated region
      $region17: #{my_conv_transpose2d.1} parent=11 // pred_check
        %p160 = pneg %p80
      $region18: #{my_conv_transpose2d.1} parent=11 // pred_check_branch
        %162 = sbr.rel (%p160) target = $region20
      $region19: #{my_conv_transpose2d.1} parent=11 // pred_region
        %p163 = scmp.lt.s32.totalorder %s21, 0
        %s164 = scalar_select %p163, %s21, 0
        %s165 = smul.addr %s164, 8
        %s166 = scalar_lea.vmem %s1, %s165
      $region20: #{my_conv_transpose2d.1} parent=11 // pred_fallthru
        _
    $region12: #{my_conv_transpose2d.1} parent=5 // pred_fallthru
      _
    %p167 = scmp.lt.s32.totalorder %s9, 2
    // Predicated region
    $region21: #{my_conv_transpose2d.1} parent=5 // pred_check
      %p168 = pneg %p167
    $region22: #{my_conv_transpose2d.1} parent=5 // pred_check_branch
      %170 = sbr.rel (%p168) target = $region24
    $region23: #{my_conv_transpose2d.1} parent=5 // pred_region
      // Predicated region
      $region25: #{my_conv_transpose2d.1} parent=23 // pred_check
        %p171 = pneg %p102
      $region26: #{my_conv_transpose2d.1} parent=23 // pred_check_branch
        %173 = sbr.rel (%p171) target = $region28
      $region27: #{my_conv_transpose2d.1} parent=23 // pred_region
        %p174 = scmp.lt.s32.totalorder %s16, 1
        %s175 = scalar_select %p174, %s16, 1
        %p176 = scmp.lt.s32.totalorder %s17, 0
        %s177 = scalar_select %p176, %s17, 0
        %s178 = smul.addr %s177, 3
        %s179 = smul.addr %s175, 3
        %s180 = sadd.s32 %s178, %s179
        %s181 = smul.addr %s180, 8
        %s182 = scalar_lea.vmem %s2, %s181
      $region28: #{my_conv_transpose2d.1} parent=23 // pred_fallthru
        _
    $region24: #{my_conv_transpose2d.1} parent=5 // pred_fallthru
      _
    %p183 = scmp.le.s32.totalorder 1, %s9
    %p184 = scmp.lt.s32.totalorder %s9, 3
    %p185 = pnand %p183, %p184
    %p186 = pneg %p185
    // Predicated region
    $region29: #{my_conv_transpose2d.1} parent=5 // pred_check
      _
    $region30: #{my_conv_transpose2d.1} parent=5 // pred_check_branch
      %188 = sbr.rel (%p185) target = $region32
    $region31: #{my_conv_transpose2d.1} parent=5 // pred_region
      %s189 = ssub.s32 %s9, 1
      %p190 = scmp.lt.s32.totalorder %s21, 0
      %s191 = scalar_select %p190, %s21, 0
      %s192 = smul.addr %s191, 8
      %s193 = scalar_lea.vmem %s0, %s192
      %p194 = pneg %p54
      %p195 = pneg %p51
      %p196 = scmp.lt.s32.totalorder %s21, 0
      %s197 = scalar_select %p196, %s21, 0
      %s198 = smul.addr %s197, 8
      %s199 = scalar_lea.vmem %s1, %s198
      %p200 = pneg %p80
      %p201 = pneg %p77
      %p202 = scmp.lt.s32.totalorder %s19, 1
      %s203 = scalar_select %p202, %s19, 1
      %p204 = scmp.lt.s32.totalorder %s20, 0
      %s205 = scalar_select %p204, %s20, 0
      %s206 = smul.addr %s205, 3
      %s207 = smul.addr %s203, 3
      %s208 = sadd.s32 %s206, %s207
      %s209 = smul.addr %s208, 8
      %s210 = scalar_lea.vmem %s2, %s209
      %p211 = pneg %p108
      %p212 = pneg %p105
      %p213 = pneg %p138
      %p214 = pneg %p135
      %s215 = smul.u32 2, %s20
      %p216 = scmp.lt.s32.totalorder %s19, 1
      %s217 = scalar_select %p216, %s19, 1
      %p218 = scmp.lt.s32.totalorder %s21, 0
      %s219 = scalar_select %p218, %s21, 0
      %p220 = scmp.lt.s32.totalorder %s215, 1
      %s221 = scalar_select %p220, %s215, 1
      %s222 = smul.addr %s219, 2
      %s223 = sadd.s32 %s221, %s222
      %s224 = smul.addr %s217, 8
      %s225 = sadd.s32 %s223, %s224
      %s226 = smul.addr %s225, 8
      %s227 = scalar_lea.vmem %s3, %s226
      %p228 = scmp.lt.s32.totalorder %s21, 0
      %s229 = scalar_select %p228, %s21, 0
      %s230 = smul.addr %s229, 8
      %s231 = scalar_lea.vmem %s0, %s230
      %p232 = scmp.lt.s32.totalorder %s21, 0
      %s233 = scalar_select %p232, %s21, 0
      %s234 = smul.addr %s233, 8
      %s235 = scalar_lea.vmem %s1, %s234
      %p236 = scmp.lt.s32.totalorder %s19, 1
      %s237 = scalar_select %p236, %s19, 1
      %p238 = scmp.lt.s32.totalorder %s20, 0
      %s239 = scalar_select %p238, %s20, 0
      %s240 = smul.addr %s239, 3
      %s241 = smul.addr %s237, 3
      %s242 = sadd.s32 %s240, %s241
      %s243 = smul.addr %s242, 8
      %s244 = scalar_lea.vmem %s2, %s243
      %s245 = smul.u32 2, %s20
      %p246 = scmp.lt.s32.totalorder %s19, 1
      %s247 = scalar_select %p246, %s19, 1
      %p248 = scmp.lt.s32.totalorder %s21, 0
      %s249 = scalar_select %p248, %s21, 0
      %p250 = scmp.lt.s32.totalorder %s245, 1
      %s251 = scalar_select %p250, %s245, 1
      %s252 = smul.addr %s249, 2
      %s253 = sadd.s32 %s251, %s252
      %s254 = smul.addr %s247, 8
      %s255 = sadd.s32 %s253, %s254
      %s256 = smul.addr %s255, 8
      %s257 = scalar_lea.vmem %s3, %s256
      %s258 = smul.u32 2, %s20
      %v259 = vld [vmem:[%s244] sm:$0xff]
      %v260 = vld [vmem:[%s244 + $0x8] sm:$0xff]
      %v261 = vld [vmem:[%s244 + $0x10] sm:$0xff]
      %v262 = vld [vmem:[%s235] sm:$0xff]
      %v263 = vld [vmem:[%s231] sm:$0xff]
      %vm264 = vcmask 64512
      %v266 = vsel %vm264, %v263, 0
      %268 = vmatpush.msra.mxu0 0.0
      %269 = vmatpush.msra.mxu0 0.0
      %270 = vmatpush.msra.mxu0 0.0
      %271 = vmatpush.msra.mxu0 0.0
      %272 = vmatpush.msra.mxu0 0.0
      %273 = vmatpush.msra.mxu0 0.0
      %274 = vmatpush.msra.mxu0 0.0
      %275 = vmatpush.msra.mxu0 0.0
      %276 = vmatpush.msra.mxu0 0.0
      %277 = vmatpush.msra.mxu0 0.0
      %278 = vmatpush.msra.mxu0 0.0
      %279 = vmatpush.msra.mxu0 0.0
      %280 = vmatpush.msra.mxu0 0.0
      %281 = vmatpush.msra.mxu0 0.0
      %282 = vmatpush.msra.mxu0 0.0
      %283 = vmatpush.msra.mxu0 %v259
      %284 = vmatmul.f32.gmra.mxu0 %v266
      %v285 = vpop.f32.mrf.mxu0
      %v286 = vadd.f32 0.0, %v285
      %287 = vdwg.mxu0
      %288 = vmatpush.msra.mxu0 0.0
      %289 = vmatpush.msra.mxu0 0.0
      %290 = vmatpush.msra.mxu0 0.0
      %291 = vmatpush.msra.mxu0 0.0
      %292 = vmatpush.msra.mxu0 0.0
      %293 = vmatpush.msra.mxu0 0.0
      %294 = vmatpush.msra.mxu0 0.0
      %295 = vmatpush.msra.mxu0 0.0
      %296 = vmatpush.msra.mxu0 0.0
      %297 = vmatpush.msra.mxu0 0.0
      %298 = vmatpush.msra.mxu0 0.0
      %299 = vmatpush.msra.mxu0 0.0
      %300 = vmatpush.msra.mxu0 0.0
      %301 = vmatpush.msra.mxu0 0.0
      %302 = vmatpush.msra.mxu0 0.0
      %303 = vmatpush.msra.mxu0 %v260
      %304 = vmatmul.f32.gmra.mxu0 %v266
      %v305 = vpop.f32.mrf.mxu0
      %v306 = vadd.f32 0.0, %v305
      %307 = vdwg.mxu0
      %308 = vst [vmem:[#allocation2] sm:$0xff] %v286
      %309 = vst [vmem:[#allocation2 + $0x8] sm:$0xff] %v306
      %v310 = vld [vmem:[#allocation2] sm:$0xff]
      %v311 = vld [vmem:[#allocation2 + $0x8] sm:$0xff]
      %313 = vset.pattern.permute.xlu0 0
      %314 = vperm.xlu0 %313, %v262
      %v315 = vpop.permute.xlu0 %314
      %v317 = vadd.f32 %v310, %v315
      %v318 = vadd.f32 %v311, %v315
      %319 = vst [vmem:[%s257] sm:$0xff] %v317
      %320 = vst [vmem:[%s257 + $0x8] sm:$0xff] %v318
      %s321 = scalar_lea.vmem %s231, 8
      %v322 = vld [vmem:[%s321] sm:$0xff]
      %v324 = vsel %vm264, %v322, 0
      %326 = vmatpush.msra.mxu0 0.0
      %327 = vmatpush.msra.mxu0 0.0
      %328 = vmatpush.msra.mxu0 0.0
      %329 = vmatpush.msra.mxu0 0.0
      %330 = vmatpush.msra.mxu0 0.0
      %331 = vmatpush.msra.mxu0 0.0
      %332 = vmatpush.msra.mxu0 0.0
      %333 = vmatpush.msra.mxu0 0.0
      %334 = vmatpush.msra.mxu0 0.0
      %335 = vmatpush.msra.mxu0 0.0
      %336 = vmatpush.msra.mxu0 0.0
      %337 = vmatpush.msra.mxu0 0.0
      %338 = vmatpush.msra.mxu0 0.0
      %339 = vmatpush.msra.mxu0 0.0
      %340 = vmatpush.msra.mxu0 0.0
      %341 = vmatpush.msra.mxu0 %v259
      %342 = vmatmul.f32.gmra.mxu0 %v324
      %v343 = vpop.f32.mrf.mxu0
      %v344 = vadd.f32 0.0, %v343
      %345 = vdwg.mxu0
      %346 = vmatpush.msra.mxu0 0.0
      %347 = vmatpush.msra.mxu0 0.0
      %348 = vmatpush.msra.mxu0 0.0
      %349 = vmatpush.msra.mxu0 0.0
      %350 = vmatpush.msra.mxu0 0.0
      %351 = vmatpush.msra.mxu0 0.0
      %352 = vmatpush.msra.mxu0 0.0
      %353 = vmatpush.msra.mxu0 0.0
      %354 = vmatpush.msra.mxu0 0.0
      %355 = vmatpush.msra.mxu0 0.0
      %356 = vmatpush.msra.mxu0 0.0
      %357 = vmatpush.msra.mxu0 0.0
      %358 = vmatpush.msra.mxu0 0.0
      %359 = vmatpush.msra.mxu0 0.0
      %360 = vmatpush.msra.mxu0 0.0
      %361 = vmatpush.msra.mxu0 %v260
      %362 = vmatmul.f32.gmra.mxu0 %v324
      %v363 = vpop.f32.mrf.mxu0
      %v364 = vadd.f32 0.0, %v363
      %365 = vdwg.mxu0
      %366 = vst [vmem:[#allocation2] sm:$0xff] %v344
      %367 = vst [vmem:[#allocation2 + $0x8] sm:$0xff] %v364
      %v368 = vld [vmem:[#allocation2] sm:$0xff]
      %v369 = vld [vmem:[#allocation2 + $0x8] sm:$0xff]
      %v370 = vadd.f32 %v368, %v315
      %v371 = vadd.f32 %v369, %v315
      %s372 = scalar_lea.vmem %s257, 16
      %373 = vst [vmem:[%s372] sm:$0xff] %v370
      %374 = vst [vmem:[%s372 + $0x8] sm:$0xff] %v371
      %s375 = scalar_lea.vmem %s231, 16
      %v376 = vld [vmem:[%s375] sm:$0xff]
      %380 = vrot.lane.b32.xlu0 %v259, 112
      %v381 = vpop.permute.xlu0 %380
      %382 = vrot.lane.b32.xlu0 %v260, 112
      %v383 = vpop.permute.xlu0 %382
      %384 = vrot.lane.b32.xlu0 %v261, 112
      %v385 = vpop.permute.xlu0 %384
      %vm386 = vcmask 916480
      %v387 = vsel %vm386, %v381, %v383
      %v388 = vsel %vm386, %v383, %v385
      %v392 = vsel %vm264, %v376, 0
      %394 = vmatpush.msra.mxu0 0.0
      %395 = vmatpush.msra.mxu0 0.0
      %396 = vmatpush.msra.mxu0 0.0
      %397 = vmatpush.msra.mxu0 0.0
      %398 = vmatpush.msra.mxu0 0.0
      %399 = vmatpush.msra.mxu0 0.0
      %400 = vmatpush.msra.mxu0 0.0
      %401 = vmatpush.msra.mxu0 0.0
      %402 = vmatpush.msra.mxu0 0.0
      %403 = vmatpush.msra.mxu0 0.0
      %404 = vmatpush.msra.mxu0 0.0
      %405 = vmatpush.msra.mxu0 0.0
      %406 = vmatpush.msra.mxu0 0.0
      %407 = vmatpush.msra.mxu0 0.0
      %408 = vmatpush.msra.mxu0 0.0
      %409 = vmatpush.msra.mxu0 %v387
      %410 = vmatmul.f32.gmra.mxu0 %v392
      %v411 = vpop.f32.mrf.mxu0
      %v412 = vadd.f32 0.0, %v411
      %413 = vdwg.mxu0
      %414 = vmatpush.msra.mxu0 0.0
      %415 = vmatpush.msra.mxu0 0.0
      %416 = vmatpush.msra.mxu0 0.0
      %417 = vmatpush.msra.mxu0 0.0
      %418 = vmatpush.msra.mxu0 0.0
      %419 = vmatpush.msra.mxu0 0.0
      %420 = vmatpush.msra.mxu0 0.0
      %421 = vmatpush.msra.mxu0 0.0
      %422 = vmatpush.msra.mxu0 0.0
      %423 = vmatpush.msra.mxu0 0.0
      %424 = vmatpush.msra.mxu0 0.0
      %425 = vmatpush.msra.mxu0 0.0
      %426 = vmatpush.msra.mxu0 0.0
      %427 = vmatpush.msra.mxu0 0.0
      %428 = vmatpush.msra.mxu0 0.0
      %429 = vmatpush.msra.mxu0 %v388
      %430 = vmatmul.f32.gmra.mxu0 %v392
      %v431 = vpop.f32.mrf.mxu0
      %v432 = vadd.f32 0.0, %v431
      %433 = vdwg.mxu0
      %434 = vst [vmem:[#allocation2] sm:$0xff] %v412
      %435 = vst [vmem:[#allocation2 + $0x8] sm:$0xff] %v432
      %s436 = scalar_lea.vmem %s231, 24
      %v437 = vld [vmem:[%s436] sm:$0xff]
      %v439 = vsel %vm264, %v437, 0
      %441 = vmatpush.msra.mxu0 0.0
      %442 = vmatpush.msra.mxu0 0.0
      %443 = vmatpush.msra.mxu0 0.0
      %444 = vmatpush.msra.mxu0 0.0
      %445 = vmatpush.msra.mxu0 0.0
      %446 = vmatpush.msra.mxu0 0.0
      %447 = vmatpush.msra.mxu0 0.0
      %448 = vmatpush.msra.mxu0 0.0
      %449 = vmatpush.msra.mxu0 0.0
      %450 = vmatpush.msra.mxu0 0.0
      %451 = vmatpush.msra.mxu0 0.0
      %452 = vmatpush.msra.mxu0 0.0
      %453 = vmatpush.msra.mxu0 0.0
      %454 = vmatpush.msra.mxu0 0.0
      %455 = vmatpush.msra.mxu0 0.0
      %456 = vmatpush.msra.mxu0 %v259
      %457 = vmatmul.f32.gmra.mxu0 %v439
      %v458 = vpop.f32.mrf.mxu0
      %v459 = vadd.f32 0.0, %v458
      %460 = vdwg.mxu0
      %461 = vmatpush.msra.mxu0 0.0
      %462 = vmatpush.msra.mxu0 0.0
      %463 = vmatpush.msra.mxu0 0.0
      %464 = vmatpush.msra.mxu0 0.0
      %465 = vmatpush.msra.mxu0 0.0
      %466 = vmatpush.msra.mxu0 0.0
      %467 = vmatpush.msra.mxu0 0.0
      %468 = vmatpush.msra.mxu0 0.0
      %469 = vmatpush.msra.mxu0 0.0
      %470 = vmatpush.msra.mxu0 0.0
      %471 = vmatpush.msra.mxu0 0.0
      %472 = vmatpush.msra.mxu0 0.0
      %473 = vmatpush.msra.mxu0 0.0
      %474 = vmatpush.msra.mxu0 0.0
      %475 = vmatpush.msra.mxu0 0.0
      %476 = vmatpush.msra.mxu0 %v260
      %477 = vmatmul.f32.gmra.mxu0 %v439
      %v478 = vpop.f32.mrf.mxu0
      %v479 = vadd.f32 0.0, %v478
      %480 = vdwg.mxu0
      %v481 = vld [vmem:[#allocation2] sm:$0xff]
      %v482 = vld [vmem:[#allocation2 + $0x8] sm:$0xff]
      %v483 = vadd.f32 %v481, %v459
      %v484 = vadd.f32 %v482, %v479
      %485 = vst [vmem:[#allocation2] sm:$0xff] %v483
      %486 = vst [vmem:[#allocation2 + $0x8] sm:$0xff] %v484
      %v487 = vld [vmem:[#allocation2] sm:$0xff]
      %v488 = vld [vmem:[#allocation2 + $0x8] sm:$0xff]
      %v489 = vadd.f32 %v487, %v315
      %v490 = vadd.f32 %v488, %v315
      %s491 = scalar_lea.vmem %s257, 32
      %492 = vst [vmem:[%s491] sm:$0xff] %v489
      %493 = vst [vmem:[%s491 + $0x8] sm:$0xff] %v490
      %s494 = scalar_lea.vmem %s231, 32
      %v495 = vld [vmem:[%s494] sm:$0xff]
      %v497 = vsel %vm264, %v495, 0
      %499 = vmatpush.msra.mxu0 0.0
      %500 = vmatpush.msra.mxu0 0.0
      %501 = vmatpush.msra.mxu0 0.0
      %502 = vmatpush.msra.mxu0 0.0
      %503 = vmatpush.msra.mxu0 0.0
      %504 = vmatpush.msra.mxu0 0.0
      %505 = vmatpush.msra.mxu0 0.0
      %506 = vmatpush.msra.mxu0 0.0
      %507 = vmatpush.msra.mxu0 0.0
      %508 = vmatpush.msra.mxu0 0.0
      %509 = vmatpush.msra.mxu0 0.0
      %510 = vmatpush.msra.mxu0 0.0
      %511 = vmatpush.msra.mxu0 0.0
      %512 = vmatpush.msra.mxu0 0.0
      %513 = vmatpush.msra.mxu0 0.0
      %514 = vmatpush.msra.mxu0 %v387
      %515 = vmatmul.f32.gmra.mxu0 %v497
      %v516 = vpop.f32.mrf.mxu0
      %v517 = vadd.f32 0.0, %v516
      %518 = vdwg.mxu0
      %519 = vmatpush.msra.mxu0 0.0
      %520 = vmatpush.msra.mxu0 0.0
      %521 = vmatpush.msra.mxu0 0.0
      %522 = vmatpush.msra.mxu0 0.0
      %523 = vmatpush.msra.mxu0 0.0
      %524 = vmatpush.msra.mxu0 0.0
      %525 = vmatpush.msra.mxu0 0.0
      %526 = vmatpush.msra.mxu0 0.0
      %527 = vmatpush.msra.mxu0 0.0
      %528 = vmatpush.msra.mxu0 0.0
      %529 = vmatpush.msra.mxu0 0.0
      %530 = vmatpush.msra.mxu0 0.0
      %531 = vmatpush.msra.mxu0 0.0
      %532 = vmatpush.msra.mxu0 0.0
      %533 = vmatpush.msra.mxu0 0.0
      %534 = vmatpush.msra.mxu0 %v388
      %535 = vmatmul.f32.gmra.mxu0 %v497
      %v536 = vpop.f32.mrf.mxu0
      %v537 = vadd.f32 0.0, %v536
      %538 = vdwg.mxu0
      %539 = vst [vmem:[#allocation2] sm:$0xff] %v517
      %540 = vst [vmem:[#allocation2 + $0x8] sm:$0xff] %v537
      %s541 = scalar_lea.vmem %s231, 40
      %v542 = vld [vmem:[%s541] sm:$0xff]
      %v544 = vsel %vm264, %v542, 0
      %546 = vmatpush.msra.mxu0 0.0
      %547 = vmatpush.msra.mxu0 0.0
      %548 = vmatpush.msra.mxu0 0.0
      %549 = vmatpush.msra.mxu0 0.0
      %550 = vmatpush.msra.mxu0 0.0
      %551 = vmatpush.msra.mxu0 0.0
      %552 = vmatpush.msra.mxu0 0.0
      %553 = vmatpush.msra.mxu0 0.0
      %554 = vmatpush.msra.mxu0 0.0
      %555 = vmatpush.msra.mxu0 0.0
      %556 = vmatpush.msra.mxu0 0.0
      %557 = vmatpush.msra.mxu0 0.0
      %558 = vmatpush.msra.mxu0 0.0
      %559 = vmatpush.msra.mxu0 0.0
      %560 = vmatpush.msra.mxu0 0.0
      %561 = vmatpush.msra.mxu0 %v259
      %562 = vmatmul.f32.gmra.mxu0 %v544
      %v563 = vpop.f32.mrf.mxu0
      %v564 = vadd.f32 0.0, %v563
      %565 = vdwg.mxu0
      %566 = vmatpush.msra.mxu0 0.0
      %567 = vmatpush.msra.mxu0 0.0
      %568 = vmatpush.msra.mxu0 0.0
      %569 = vmatpush.msra.mxu0 0.0
      %570 = vmatpush.msra.mxu0 0.0
      %571 = vmatpush.msra.mxu0 0.0
      %572 = vmatpush.msra.mxu0 0.0
      %573 = vmatpush.msra.mxu0 0.0
      %574 = vmatpush.msra.mxu0 0.0
      %575 = vmatpush.msra.mxu0 0.0
      %576 = vmatpush.msra.mxu0 0.0
      %577 = vmatpush.msra.mxu0 0.0
      %578 = vmatpush.msra.mxu0 0.0
      %579 = vmatpush.msra.mxu0 0.0
      %580 = vmatpush.msra.mxu0 0.0
      %581 = vmatpush.msra.mxu0 %v260
      %582 = vmatmul.f32.gmra.mxu0 %v544
      %v583 = vpop.f32.mrf.mxu0
      %v584 = vadd.f32 0.0, %v583
      %585 = vdwg.mxu0
      %v586 = vld [vmem:[#allocation2] sm:$0xff]
      %v587 = vld [vmem:[#allocation2 + $0x8] sm:$0xff]
      %v588 = vadd.f32 %v586, %v564
      %v589 = vadd.f32 %v587, %v584
      %590 = vst [vmem:[#allocation2] sm:$0xff] %v588
      %591 = vst [vmem:[#allocation2 + $0x8] sm:$0xff] %v589
      %v592 = vld [vmem:[#allocation2] sm:$0xff]
      %v593 = vld [vmem:[#allocation2 + $0x8] sm:$0xff]
      %v594 = vadd.f32 %v592, %v315
      %v595 = vadd.f32 %v593, %v315
      %s596 = scalar_lea.vmem %s257, 48
      %597 = vst [vmem:[%s596] sm:$0xff] %v594
      %598 = vst [vmem:[%s596 + $0x8] sm:$0xff] %v595
      %s599 = smul.u32 2, %s20
      %p600 = scmp.lt.s32.totalorder %s19, 1
      %s601 = scalar_select %p600, %s19, 1
      %p602 = scmp.lt.s32.totalorder %s21, 0
      %s603 = scalar_select %p602, %s21, 0
      %p604 = scmp.lt.s32.totalorder %s599, 1
      %s605 = scalar_select %p604, %s599, 1
      %s606 = smul.addr %s603, 2
      %s607 = sadd.s32 %s605, %s606
      %s608 = smul.addr %s601, 8
      %s609 = sadd.s32 %s607, %s608
      %s610 = smul.addr %s609, 8
      %s611 = scalar_lea.vmem %s3, %s610
      // Predicated region
      $region33: #{my_conv_transpose2d.1} parent=31 // pred_check
        %p612 = pneg %p135
      $region34: #{my_conv_transpose2d.1} parent=31 // pred_check_branch
        %614 = sbr.rel (%p612) target = $region36
      $region35: #{my_conv_transpose2d.1} parent=31 // pred_region
        %s615 = smul.u32 2, %s20
      $region36: #{my_conv_transpose2d.1} parent=31 // pred_fallthru
        _
    $region32: #{my_conv_transpose2d.1} parent=5 // pred_fallthru
      _
    %p616 = scmp.le.s32.totalorder 2, %s9
    // Predicated region
    $region37: #{my_conv_transpose2d.1} parent=5 // pred_check
      %p617 = pneg %p616
    $region38: #{my_conv_transpose2d.1} parent=5 // pred_check_branch
      %619 = sbr.rel (%p617) target = $region40
    $region39: #{my_conv_transpose2d.1} parent=5 // pred_region
      %s620 = ssub.s32 %s9, 2
      // Predicated region
      $region41: #{my_conv_transpose2d.1} parent=39 // pred_check
        %p621 = pneg %p141
      $region42: #{my_conv_transpose2d.1} parent=39 // pred_check_branch
        %623 = sbr.rel (%p621) target = $region44
      $region43: #{my_conv_transpose2d.1} parent=39 // pred_region
        %s624 = smul.u32 2, %s23
        %p625 = scmp.lt.s32.totalorder %s22, 1
        %s626 = scalar_select %p625, %s22, 1
        %p627 = scmp.lt.s32.totalorder %s24, 0
        %s628 = scalar_select %p627, %s24, 0
        %p629 = scmp.lt.s32.totalorder %s624, 1
        %s630 = scalar_select %p629, %s624, 1
        %s631 = smul.addr %s628, 2
        %s632 = sadd.s32 %s630, %s631
        %s633 = smul.addr %s626, 8
        %s634 = sadd.s32 %s632, %s633
        %s635 = smul.addr %s634, 8
        %s636 = scalar_lea.vmem %s3, %s635
      $region44: #{my_conv_transpose2d.1} parent=39 // pred_fallthru
        _
    $region40: #{my_conv_transpose2d.1} parent=5 // pred_fallthru
      _
  $region6: #{my_conv_transpose2d.1} parent=0 // loop_footer
    %s13 = sadd.s32 1, %s9
  $region7: #{my_conv_transpose2d.1} parent=0 // loop_footer_branch
    %8 = sbr.rel target = $region3
  $region8: #{my_conv_transpose2d.1} parent=0 // loop_exit
    _

</llo_original>
